<compile_context>
chip_gen: v5e
topology: v5e:2x2
jax: 0.10.0
libtpu: 0.0.40
codegen_flags: <defaults>
</compile_context>

<pallas_src>
import functools

import numpy as np

import jax
import jax.numpy as jnp
from jax.experimental import pallas as pl
from jax.experimental.pallas import tpu as pltpu


def _round_up(x, m):
    return -(-x // m) * m


def _geometry(H, W, k=3):
    """Static conv geometry shared by prepare_gemm_params and the wrapper."""
    oh1 = (H - k) // 2 + 1
    ow1 = (W - k) // 2 + 1
    oh2, ow2 = oh1 - (k - 1), ow1 - (k - 1)
    n1 = oh1 * ow1                       # conv1 output grid positions per sample
    n2 = oh2 * ow2                       # conv2 valid output positions per sample
    n1p = _round_up(n1, 8)               # padded conv1 grid (fc operand width)
    max_shift = (k - 1) * ow1 + (k - 1)  # largest conv2 tap offset
    n1s = _round_up(n1p + max_shift, 8)  # conv1 slab incl. shift headroom
    return dict(oh1=oh1, ow1=ow1, oh2=oh2, ow2=ow2, n1=n1, n2=n2, n1p=n1p, n1s=n1s)


# ----------------------------- fused Pallas kernel -----------------------------

def _fused_forward_kernel(p_ref, w1_ref, b1_ref, w2_ref, b2_ref,
                          wfc_ref, bfc_ref, g_ref, beta_ref,
                          wt1_ref, bt1_ref, wt2_ref, bt2_ref, wt3_ref, bt3_ref,
                          o_ref, c1_s, *, nf, n1p, ow1, kk):
    """One sample per grid step (all intermediates stay in VMEM / vregs)."""
    # ---- conv1 as a lane-major GEMM (+bias, ReLU); obs/255 folded into w1 ----
    # p_ref block: (1, 9*C, n1s) -> (9*C, n1s); pad positions are zero columns.
    c1 = jnp.maximum(
        jnp.dot(w1_ref[...], p_ref[0], preferred_element_type=jnp.float32)
        + b1_ref[...], 0.0)                                   # (nf, n1s)
    c1_s[...] = c1                                            # fully rewritten each step

    # ---- conv2 as ONE K=9*nf GEMM over the 9 shifted tap windows -------------
    shifts = [kh * ow1 + kw for kh in range(kk) for kw in range(kk)]
    taps = jnp.concatenate([c1_s[:, d:d + n1p] for d in shifts], axis=0)  # (9*nf, n1p)
    c2 = jnp.maximum(
        jnp.dot(w2_ref[...], taps, preferred_element_type=jnp.float32)
        + b2_ref[...], 0.0)                                   # (nf, n1p)
    # Invalid / padded grid positions hold garbage-but-finite values; their
    # columns in wfc are zero (prepare-time), so they never reach the output.

    # ---- flatten (f-major) via slice + lane-concat; NCHW order + valid-row
    #      selection live entirely in the prepare-time wfc permutation ---------
    h = jnp.concatenate([c2[f:f + 1, :] for f in range(nf)], axis=1)      # (1, nf*n1p)

    # ---- encoder fc + LayerNorm + tanh (row orientation, this sample) --------
    z = jnp.dot(h, wfc_ref[...], preferred_element_type=jnp.float32) + bfc_ref[...]
    mu = jnp.mean(z, axis=-1, keepdims=True)
    diff = z - mu
    var = jnp.mean(diff * diff, axis=-1, keepdims=True)       # var from (z-mu)^2
    feat = jnp.tanh(diff * jax.lax.rsqrt(var + 1e-5) * g_ref[...] + beta_ref[...])

    # ---- trunk MLP ------------------------------------------------------------
    x1 = jnp.maximum(jnp.dot(feat, wt1_ref[...],
                             preferred_element_type=jnp.float32) + bt1_ref[...], 0.0)
    x2 = jnp.maximum(jnp.dot(x1, wt2_ref[...],
                             preferred_element_type=jnp.float32) + bt2_ref[...], 0.0)
    o_ref[0] = jnp.dot(x2, wt3_ref[...],
                       preferred_element_type=jnp.float32) + bt3_ref[...]   # (1, out_dim)


# ------------------------------ weight preparation --------------------------

def prepare_gemm_params(params, obs_shape):
    """Hoist ALL weight-layout work out of the forward path (run ONCE)."""
    C, H, W = obs_shape
    geo = _geometry(H, W)
    nf = params["w_c1"].shape[0]
    feat_dim, flat = params["w_fc"].shape
    n1p, n2 = geo["n1p"], geo["n2"]
    oh2, ow2, ow1 = geo["oh2"], geo["ow2"], geo["ow1"]

    def conv_w_T(w):   # torch (Cout,Cin,KH,KW) -> (Cout, KH*KW*Cin), (kh,kw,ci) order
        cout = w.shape[0]
        return jnp.transpose(w, (2, 3, 1, 0)).reshape(-1, cout).T

    # Expanded fc weight: row index f*n1p + grid_pos.  Valid grid positions map to
    # the torch NCHW flat column f*n2 + i*ow2 + j; invalid/padded positions map to
    # an appended zero column.  This single permutation replaces the in-kernel
    # flatten loop AND the conv2 row-compaction loop.
    idx = np.full((nf, n1p), flat, np.int32)
    ii, jj = np.meshgrid(np.arange(oh2), np.arange(ow2), indexing="ij")
    grid_pos = (ii * ow1 + jj).reshape(-1)
    torch_pos = (ii * ow2 + jj).reshape(-1)
    for f in range(nf):
        idx[f, grid_pos] = f * n2 + torch_pos
    w_aug = jnp.concatenate(
        [params["w_fc"], jnp.zeros((feat_dim, 1), jnp.float32)], axis=1)
    wfc_flat = w_aug[:, idx.reshape(-1)].T                    # (nf*n1p, feat_dim)

    return dict(
        w1g=conv_w_T(params["w_c1"]) * (1.0 / 255.0),         # (nf, 9*C), /255 folded
        b1=params["b_c1"].reshape(-1, 1),
        w2g=conv_w_T(params["w_c2"]),                         # (nf, 9*nf)
        b2=params["b_c2"].reshape(-1, 1),
        wfc=wfc_flat, bfc=params["b_fc"].reshape(1, -1),
        ln_g=params["ln_g"].reshape(1, -1), ln_b=params["ln_b"].reshape(1, -1),
        w1=params["w1"].T, b1t=params["b1"].reshape(1, -1),   # trunk in row orientation
        w2=params["w2"].T, b2t=params["b2"].reshape(1, -1),
        w3=params["w3"].T, b3t=params["b3"].reshape(1, -1),
    )


# --------------------------------- forward ----------------------------------

def prop_state_forward(prep, obs_nchw):
    """Full PropState.forward.  obs_nchw: (B, C, H, W) float32 -> (B, out_dim)."""
    B, C, H, W = obs_nchw.shape
    geo = _geometry(H, W)
    oh1, ow1, n1, n1p, n1s = geo["oh1"], geo["ow1"], geo["n1"], geo["n1p"], geo["n1s"]
    nf = prep["w1g"].shape[0]
    out_dim = prep["w3"].shape[1]

    # conv1 im2col patches, transposed to (taps, positions), zero-padded position
    # columns supply the shift headroom (no in-kernel zero fills).
    # TODO(synk): move this stride-2 gather in-kernel / set allow_input_fusion.
    x = jnp.transpose(obs_nchw, (0, 2, 3, 1))                             # NHWC
    cols = [x[:, kh:kh + 2 * oh1:2, kw:kw + 2 * ow1:2, :]
            for kh in range(3) for kw in range(3)]
    p = jnp.stack(cols, axis=3).reshape(B, n1, 9 * C)                     # (kh,kw,ci)
    p = jnp.pad(p, ((0, 0), (0, n1s - n1), (0, 0)))
    pT = jnp.transpose(p, (0, 2, 1))                                      # (B, 9*C, n1s)

    kernel = functools.partial(_fused_forward_kernel, nf=nf, n1p=n1p, ow1=ow1, kk=3)

    def _full(a):       # whole-array block, grid-invariant
        return pl.BlockSpec(a.shape, lambda b, _n=a.ndim: (0,) * _n)

    weight_keys = ("w1g", "b1", "w2g", "b2", "wfc", "bfc", "ln_g", "ln_b",
                   "w1", "b1t", "w2", "b2t", "w3", "b3t")

    out = pl.pallas_call(
        kernel,
        out_shape=jax.ShapeDtypeStruct((B, 1, out_dim), jnp.float32),
        grid=(B,),
        in_specs=[pl.BlockSpec((1, 9 * C, n1s), lambda b: (b, 0, 0))]
                 + [_full(prep[k]) for k in weight_keys],
        out_specs=pl.BlockSpec((1, 1, out_dim), lambda b: (b, 0, 0)),
        scratch_shapes=[pltpu.VMEM((nf, n1s), jnp.float32)],   # conv1 slab (per sample)
        compiler_params=pltpu.CompilerParams(
            dimension_semantics=("parallel",),
            vmem_limit_bytes=32 * 1024 * 1024),
    )(pT, *[prep[k] for k in weight_keys])

    return out.reshape(B, out_dim)


# ------------------------------ init (matches torch weight_init) ------------

def orthogonal(key, shape, gain=1.0):
    rows, cols = shape
    n = max(rows, cols)
    a = jax.random.normal(key, (n, n), dtype=jnp.float32)
    q, r = jnp.linalg.qr(a)
    q = q * jnp.sign(jnp.diag(r))[None, :]
    return (gain * q[:rows, :cols]).astype(jnp.float32)


def init_params(key, obs_shape, prop_obs_shape, hidden_dim,
                encoder_feature_dim, num_filters):
    C_in, H, W = obs_shape
    keys = jax.random.split(key, 8)
    relu_gain = jnp.sqrt(2.0).astype(jnp.float32)

    def conv_weight(k, cout, cin):      # zero except orthogonal centre tap
        w = jnp.zeros((cout, cin, 3, 3), dtype=jnp.float32)
        centre = orthogonal(k, (cout, cin), gain=relu_gain)
        return w.at[:, :, 1, 1].set(centre)

    w_c1 = conv_weight(keys[0], num_filters, C_in)
    b_c1 = jnp.zeros((num_filters,), jnp.float32)
    w_c2 = conv_weight(keys[1], num_filters, num_filters)
    b_c2 = jnp.zeros((num_filters,), jnp.float32)

    oh1 = (H - 3) // 2 + 1
    oh2 = oh1 - 2
    flat_dim = num_filters * oh2 * oh2

    w_fc = orthogonal(keys[2], (encoder_feature_dim, flat_dim))   # torch (out, in)
    b_fc = jnp.zeros((encoder_feature_dim,), jnp.float32)
    ln_g = jnp.ones((encoder_feature_dim,), jnp.float32)
    ln_b = jnp.zeros((encoder_feature_dim,), jnp.float32)

    w1 = orthogonal(keys[3], (hidden_dim, encoder_feature_dim))
    b1 = jnp.zeros((hidden_dim,), jnp.float32)
    w2 = orthogonal(keys[4], (hidden_dim, hidden_dim))
    b2 = jnp.zeros((hidden_dim,), jnp.float32)
    w3 = orthogonal(keys[5], (prop_obs_shape, hidden_dim))
    b3 = jnp.zeros((prop_obs_shape,), jnp.float32)

    return dict(w_c1=w_c1, b_c1=b_c1, w_c2=w_c2, b_c2=b_c2,
                w_fc=w_fc, b_fc=b_fc, ln_g=ln_g, ln_b=ln_b,
                w1=w1, b1=b1, w2=w2, b2=b2, w3=w3, b3=b3)


# --------------------------------- reference ---------------------------------

def prop_state_reference(params, obs_nchw):
    """Pure-JAX reference (same math, no Pallas)."""
    x = obs_nchw / 255.0
    c1 = jax.lax.conv_general_dilated(
        x, params["w_c1"], window_strides=(2, 2), padding="VALID",
        dimension_numbers=("NCHW", "OIHW", "NCHW"))
    c1 = jnp.maximum(c1 + params["b_c1"][None, :, None, None], 0.0)
    c2 = jax.lax.conv_general_dilated(
        c1, params["w_c2"], window_strides=(1, 1), padding="VALID",
        dimension_numbers=("NCHW", "OIHW", "NCHW"))
    c2 = jnp.maximum(c2 + params["b_c2"][None, :, None, None], 0.0)
    h = c2.reshape(c2.shape[0], -1)
    z = h @ params["w_fc"].T + params["b_fc"]
    mu = jnp.mean(z, -1, keepdims=True)
    var = jnp.mean((z - mu) ** 2, -1, keepdims=True)
    feat = jnp.tanh((z - mu) / jnp.sqrt(var + 1e-5) * params["ln_g"] + params["ln_b"])
    x1 = jnp.maximum(feat @ params["w1"].T + params["b1"], 0.0)
    x2 = jnp.maximum(x1 @ params["w2"].T + params["b2"], 0.0)
    return x2 @ params["w3"].T + params["b3"]


# ------------------------------------ main ------------------------------------

if __name__ == "__main__":
    # PropState(obs_shape=(4,16,16), prop_obs_shape=8, hidden_dim=32,
    #           encoder_type="pixel", encoder_feature_dim=32,
    #           num_layers=2, num_filters=8)
    obs_shape = (4, 16, 16)
    prop_obs_shape = 8
    hidden_dim = 32
    encoder_feature_dim = 32
    num_filters = 8
    batch = 2

    key = jax.random.PRNGKey(0)
    k_param, k_obs = jax.random.split(key)
    params = init_params(k_param, obs_shape, prop_obs_shape, hidden_dim,
                         encoder_feature_dim, num_filters)
    prep = prepare_gemm_params(params, obs_shape)      # one-time weight layout work
    obs = jax.random.uniform(k_obs, (batch,) + obs_shape,
                             minval=0.0, maxval=255.0, dtype=jnp.float32)

    fwd = jax.jit(prop_state_forward)
    out = jax.block_until_ready(fwd(prep, obs))
    ref = jax.block_until_ready(prop_state_reference(params, obs))

    assert out.shape == (batch, prop_obs_shape), out.shape
    # Tolerance allows for f32 accumulation-order differences (fused K=72 conv2
    # GEMM / expanded fc GEMM) vs. the XLA reference.
    err = float(jnp.max(jnp.abs(out - ref)))
    assert jnp.allclose(out, ref, atol=1e-3, rtol=1e-3), err

    print("KERNEL_OK")
</pallas_src>

<mosaic_0001>
module attributes {stable_mosaic.version = 11 : i64} {
  func.func @_fused_forward_kernel(%arg0: i32, %arg1: memref<1x36x72xf32, #tpu.memory_space<vmem>>, %arg2: memref<8x36xf32, #tpu.memory_space<vmem>>, %arg3: memref<8x1xf32, #tpu.memory_space<vmem>>, %arg4: memref<8x72xf32, #tpu.memory_space<vmem>>, %arg5: memref<8x1xf32, #tpu.memory_space<vmem>>, %arg6: memref<448x32xf32, #tpu.memory_space<vmem>>, %arg7: memref<1x32xf32, #tpu.memory_space<vmem>>, %arg8: memref<1x32xf32, #tpu.memory_space<vmem>>, %arg9: memref<1x32xf32, #tpu.memory_space<vmem>>, %arg10: memref<32x32xf32, #tpu.memory_space<vmem>>, %arg11: memref<1x32xf32, #tpu.memory_space<vmem>>, %arg12: memref<32x32xf32, #tpu.memory_space<vmem>>, %arg13: memref<1x32xf32, #tpu.memory_space<vmem>>, %arg14: memref<32x8xf32, #tpu.memory_space<vmem>>, %arg15: memref<1x8xf32, #tpu.memory_space<vmem>>, %arg16: memref<1x1x8xf32, #tpu.memory_space<vmem>>, %arg17: memref<8x72xf32, #tpu.memory_space<vmem>>) attributes {dimension_semantics = [#tpu.dimension_semantics<parallel>], iteration_bounds = array<i64: 2>, scalar_prefetch = 0 : i64, scratch_operands = 1 : i64, tpu.core_type = #tpu.core_type<tc>, window_params = [{transform_indices = @transform_0, window_bounds = array<i64: 1, 36, 72>}, {pipeline_mode = #tpu.pipeline_mode<synchronous>, transform_indices = @transform_1, window_bounds = array<i64: 8, 36>}, {pipeline_mode = #tpu.pipeline_mode<synchronous>, transform_indices = @transform_2, window_bounds = array<i64: 8, 1>}, {pipeline_mode = #tpu.pipeline_mode<synchronous>, transform_indices = @transform_3, window_bounds = array<i64: 8, 72>}, {pipeline_mode = #tpu.pipeline_mode<synchronous>, transform_indices = @transform_4, window_bounds = array<i64: 8, 1>}, {pipeline_mode = #tpu.pipeline_mode<synchronous>, transform_indices = @transform_5, window_bounds = array<i64: 448, 32>}, {pipeline_mode = #tpu.pipeline_mode<synchronous>, transform_indices = @transform_6, window_bounds = array<i64: 1, 32>}, {pipeline_mode = #tpu.pipeline_mode<synchronous>, transform_indices = @transform_7, window_bounds = array<i64: 1, 32>}, {pipeline_mode = #tpu.pipeline_mode<synchronous>, transform_indices = @transform_8, window_bounds = array<i64: 1, 32>}, {pipeline_mode = #tpu.pipeline_mode<synchronous>, transform_indices = @transform_9, window_bounds = array<i64: 32, 32>}, {pipeline_mode = #tpu.pipeline_mode<synchronous>, transform_indices = @transform_10, window_bounds = array<i64: 1, 32>}, {pipeline_mode = #tpu.pipeline_mode<synchronous>, transform_indices = @transform_11, window_bounds = array<i64: 32, 32>}, {pipeline_mode = #tpu.pipeline_mode<synchronous>, transform_indices = @transform_12, window_bounds = array<i64: 1, 32>}, {pipeline_mode = #tpu.pipeline_mode<synchronous>, transform_indices = @transform_13, window_bounds = array<i64: 32, 8>}, {pipeline_mode = #tpu.pipeline_mode<synchronous>, transform_indices = @transform_14, window_bounds = array<i64: 1, 8>}, {transform_indices = @transform_15, window_bounds = array<i64: 1, 1, 8>}]} {
    %c0 = arith.constant 0 : index
    %c0_0 = arith.constant 0 : index
    %0 = vector.load %arg2[%c0, %c0_0] : memref<8x36xf32, #tpu.memory_space<vmem>>, vector<8x36xf32>
    %c0_1 = arith.constant 0 : index
    %c0_2 = arith.constant 0 : index
    %c0_3 = arith.constant 0 : index
    %1 = vector.load %arg1[%c0_1, %c0_2, %c0_3] : memref<1x36x72xf32, #tpu.memory_space<vmem>>, vector<1x36x72xf32>
    %2 = vector.shape_cast %1 : vector<1x36x72xf32> to vector<36x72xf32>
    %cst = arith.constant dense<0.000000e+00> : vector<8x72xf32>
    %3 = tpu.matmul %0, %2, %cst {dimension_numbers = #tpu.dot_dimension_numbers<[1], [0], [0], [1], [0, 0, 1, 1], [], []>} : vector<8x36xf32>, vector<36x72xf32>, vector<8x72xf32> -> vector<8x72xf32>
    %c0_4 = arith.constant 0 : index
    %c0_5 = arith.constant 0 : index
    %4 = vector.load %arg3[%c0_4, %c0_5] : memref<8x1xf32, #tpu.memory_space<vmem>>, vector<8x1xf32>
    %5 = vector.broadcast %4 : vector<8x1xf32> to vector<8x72xf32>
    %6 = arith.addf %3, %5 : vector<8x72xf32>
    %cst_6 = arith.constant 0.000000e+00 : f32
    %7 = vector.broadcast %cst_6 : f32 to vector<8x72xf32>
    %8 = arith.maximumf %6, %7 : vector<8x72xf32>
    %c0_7 = arith.constant 0 : index
    %c0_8 = arith.constant 0 : index
    %9 = vector.load %arg17[%c0_7, %c0_8] : memref<8x72xf32, #tpu.memory_space<vmem>>, vector<8x72xf32>
    tpu.vector_store %arg17[%c0_7, %c0_8], %8 {strides = array<i32>} : memref<8x72xf32, #tpu.memory_space<vmem>>, vector<8x72xf32>,
    %c0_9 = arith.constant 0 : index
    %c0_10 = arith.constant 0 : index
    %10 = vector.load %arg17[%c0_9, %c0_10] : memref<8x72xf32, #tpu.memory_space<vmem>>, vector<8x56xf32>
    %c0_11 = arith.constant 0 : index
    %c1 = arith.constant 1 : index
    %11 = vector.load %arg17[%c0_11, %c1] : memref<8x72xf32, #tpu.memory_space<vmem>>, vector<8x56xf32>
    %c0_12 = arith.constant 0 : index
    %c2 = arith.constant 2 : index
    %12 = vector.load %arg17[%c0_12, %c2] : memref<8x72xf32, #tpu.memory_space<vmem>>, vector<8x56xf32>
    %c0_13 = arith.constant 0 : index
    %c7 = arith.constant 7 : index
    %13 = vector.load %arg17[%c0_13, %c7] : memref<8x72xf32, #tpu.memory_space<vmem>>, vector<8x56xf32>
    %c0_14 = arith.constant 0 : index
    %c8 = arith.constant 8 : index
    %14 = vector.load %arg17[%c0_14, %c8] : memref<8x72xf32, #tpu.memory_space<vmem>>, vector<8x56xf32>
    %c0_15 = arith.constant 0 : index
    %c9 = arith.constant 9 : index
    %15 = vector.load %arg17[%c0_15, %c9] : memref<8x72xf32, #tpu.memory_space<vmem>>, vector<8x56xf32>
    %c0_16 = arith.constant 0 : index
    %c14 = arith.constant 14 : index
    %16 = vector.load %arg17[%c0_16, %c14] : memref<8x72xf32, #tpu.memory_space<vmem>>, vector<8x56xf32>
    %c0_17 = arith.constant 0 : index
    %c15 = arith.constant 15 : index
    %17 = vector.load %arg17[%c0_17, %c15] : memref<8x72xf32, #tpu.memory_space<vmem>>, vector<8x56xf32>
    %c0_18 = arith.constant 0 : index
    %c16 = arith.constant 16 : index
    %18 = vector.load %arg17[%c0_18, %c16] : memref<8x72xf32, #tpu.memory_space<vmem>>, vector<8x56xf32>
    %19 = tpu.concatenate %10, %11, %12, %13, %14, %15, %16, %17, %18 in 0 : vector<8x56xf32>, vector<8x56xf32>, vector<8x56xf32>, vector<8x56xf32>, vector<8x56xf32>, vector<8x56xf32>, vector<8x56xf32>, vector<8x56xf32>, vector<8x56xf32> -> vector<72x56xf32>
    %c0_19 = arith.constant 0 : index
    %c0_20 = arith.constant 0 : index
    %20 = vector.load %arg4[%c0_19, %c0_20] : memref<8x72xf32, #tpu.memory_space<vmem>>, vector<8x72xf32>
    %cst_21 = arith.constant dense<0.000000e+00> : vector<8x56xf32>
    %21 = tpu.matmul %20, %19, %cst_21 {dimension_numbers = #tpu.dot_dimension_numbers<[1], [0], [0], [1], [0, 0, 1, 1], [], []>} : vector<8x72xf32>, vector<72x56xf32>, vector<8x56xf32> -> vector<8x56xf32>
    %c0_22 = arith.constant 0 : index
    %c0_23 = arith.constant 0 : index
    %22 = vector.load %arg5[%c0_22, %c0_23] : memref<8x1xf32, #tpu.memory_space<vmem>>, vector<8x1xf32>
    %23 = vector.broadcast %22 : vector<8x1xf32> to vector<8x56xf32>
    %24 = arith.addf %21, %23 : vector<8x56xf32>
    %cst_24 = arith.constant 0.000000e+00 : f32
    %25 = vector.broadcast %cst_24 : f32 to vector<8x56xf32>
    %26 = arith.maximumf %24, %25 : vector<8x56xf32>
    %27 = vector.extract_strided_slice %26 {offsets = [0, 0], sizes = [1, 56], strides = [1, 1]} : vector<8x56xf32> to vector<1x56xf32>
    %28 = vector.extract_strided_slice %26 {offsets = [1, 0], sizes = [1, 56], strides = [1, 1]} : vector<8x56xf32> to vector<1x56xf32>
    %29 = vector.extract_strided_slice %26 {offsets = [2, 0], sizes = [1, 56], strides = [1, 1]} : vector<8x56xf32> to vector<1x56xf32>
    %30 = vector.extract_strided_slice %26 {offsets = [3, 0], sizes = [1, 56], strides = [1, 1]} : vector<8x56xf32> to vector<1x56xf32>
    %31 = vector.extract_strided_slice %26 {offsets = [4, 0], sizes = [1, 56], strides = [1, 1]} : vector<8x56xf32> to vector<1x56xf32>
    %32 = vector.extract_strided_slice %26 {offsets = [5, 0], sizes = [1, 56], strides = [1, 1]} : vector<8x56xf32> to vector<1x56xf32>
    %33 = vector.extract_strided_slice %26 {offsets = [6, 0], sizes = [1, 56], strides = [1, 1]} : vector<8x56xf32> to vector<1x56xf32>
    %34 = vector.extract_strided_slice %26 {offsets = [7, 0], sizes = [1, 56], strides = [1, 1]} : vector<8x56xf32> to vector<1x56xf32>
    %35 = tpu.concatenate %27, %28, %29, %30, %31, %32, %33, %34 in 1 : vector<1x56xf32>, vector<1x56xf32>, vector<1x56xf32>, vector<1x56xf32>, vector<1x56xf32>, vector<1x56xf32>, vector<1x56xf32>, vector<1x56xf32> -> vector<1x448xf32>
    %c0_25 = arith.constant 0 : index
    %c0_26 = arith.constant 0 : index
    %36 = vector.load %arg6[%c0_25, %c0_26] : memref<448x32xf32, #tpu.memory_space<vmem>>, vector<448x32xf32>
    %cst_27 = arith.constant dense<0.000000e+00> : vector<1x32xf32>
    %37 = tpu.matmul %35, %36, %cst_27 {dimension_numbers = #tpu.dot_dimension_numbers<[1], [0], [0], [1], [0, 0, 1, 1], [], []>} : vector<1x448xf32>, vector<448x32xf32>, vector<1x32xf32> -> vector<1x32xf32>
    %c0_28 = arith.constant 0 : index
    %c0_29 = arith.constant 0 : index
    %38 = vector.load %arg7[%c0_28, %c0_29] : memref<1x32xf32, #tpu.memory_space<vmem>>, vector<1x32xf32>
    %39 = arith.addf %37, %38 : vector<1x32xf32>
    %cst_30 = arith.constant dense<0.000000e+00> : vector<1xf32>
    %40 = vector.multi_reduction <add>, %39, %cst_30 [1] : vector<1x32xf32> to vector<1xf32>
    %41 = vector.shape_cast %40 : vector<1xf32> to vector<1x1xf32>
    %cst_31 = arith.constant 3.200000e+01 : f32
    %42 = vector.broadcast %cst_31 : f32 to vector<1x1xf32>
    %43 = arith.divf %41, %42 : vector<1x1xf32>
    %44 = vector.broadcast %43 : vector<1x1xf32> to vector<1x32xf32>
    %45 = arith.subf %39, %44 : vector<1x32xf32>
    %46 = arith.mulf %45, %45 : vector<1x32xf32>
    %cst_32 = arith.constant dense<0.000000e+00> : vector<1xf32>
    %47 = vector.multi_reduction <add>, %46, %cst_32 [1] : vector<1x32xf32> to vector<1xf32>
    %48 = vector.shape_cast %47 : vector<1xf32> to vector<1x1xf32>
    %cst_33 = arith.constant 3.200000e+01 : f32
    %49 = vector.broadcast %cst_33 : f32 to vector<1x1xf32>
    %50 = arith.divf %48, %49 : vector<1x1xf32>
    %cst_34 = arith.constant 9.99999974E-6 : f32
    %51 = vector.broadcast %cst_34 : f32 to vector<1x1xf32>
    %52 = arith.addf %50, %51 : vector<1x1xf32>
    %53 = math.rsqrt %52 : vector<1x1xf32>
    %54 = vector.broadcast %53 : vector<1x1xf32> to vector<1x32xf32>
    %55 = arith.mulf %45, %54 : vector<1x32xf32>
    %c0_35 = arith.constant 0 : index
    %c0_36 = arith.constant 0 : index
    %56 = vector.load %arg8[%c0_35, %c0_36] : memref<1x32xf32, #tpu.memory_space<vmem>>, vector<1x32xf32>
    %57 = arith.mulf %55, %56 : vector<1x32xf32>
    %c0_37 = arith.constant 0 : index
    %c0_38 = arith.constant 0 : index
    %58 = vector.load %arg9[%c0_37, %c0_38] : memref<1x32xf32, #tpu.memory_space<vmem>>, vector<1x32xf32>
    %59 = arith.addf %57, %58 : vector<1x32xf32>
    %60 = math.tanh %59 : vector<1x32xf32>
    %c0_39 = arith.constant 0 : index
    %c0_40 = arith.constant 0 : index
    %61 = vector.load %arg10[%c0_39, %c0_40] : memref<32x32xf32, #tpu.memory_space<vmem>>, vector<32x32xf32>
    %cst_41 = arith.constant dense<0.000000e+00> : vector<1x32xf32>
    %62 = tpu.matmul %60, %61, %cst_41 {dimension_numbers = #tpu.dot_dimension_numbers<[1], [0], [0], [1], [0, 0, 1, 1], [], []>} : vector<1x32xf32>, vector<32x32xf32>, vector<1x32xf32> -> vector<1x32xf32>
    %c0_42 = arith.constant 0 : index
    %c0_43 = arith.constant 0 : index
    %63 = vector.load %arg11[%c0_42, %c0_43] : memref<1x32xf32, #tpu.memory_space<vmem>>, vector<1x32xf32>
    %64 = arith.addf %62, %63 : vector<1x32xf32>
    %cst_44 = arith.constant 0.000000e+00 : f32
    %65 = vector.broadcast %cst_44 : f32 to vector<1x32xf32>
    %66 = arith.maximumf %64, %65 : vector<1x32xf32>
    %c0_45 = arith.constant 0 : index
    %c0_46 = arith.constant 0 : index
    %67 = vector.load %arg12[%c0_45, %c0_46] : memref<32x32xf32, #tpu.memory_space<vmem>>, vector<32x32xf32>
    %cst_47 = arith.constant dense<0.000000e+00> : vector<1x32xf32>
    %68 = tpu.matmul %66, %67, %cst_47 {dimension_numbers = #tpu.dot_dimension_numbers<[1], [0], [0], [1], [0, 0, 1, 1], [], []>} : vector<1x32xf32>, vector<32x32xf32>, vector<1x32xf32> -> vector<1x32xf32>
    %c0_48 = arith.constant 0 : index
    %c0_49 = arith.constant 0 : index
    %69 = vector.load %arg13[%c0_48, %c0_49] : memref<1x32xf32, #tpu.memory_space<vmem>>, vector<1x32xf32>
    %70 = arith.addf %68, %69 : vector<1x32xf32>
    %cst_50 = arith.constant 0.000000e+00 : f32
    %71 = vector.broadcast %cst_50 : f32 to vector<1x32xf32>
    %72 = arith.maximumf %70, %71 : vector<1x32xf32>
    %c0_51 = arith.constant 0 : index
    %c0_52 = arith.constant 0 : index
    %73 = vector.load %arg14[%c0_51, %c0_52] : memref<32x8xf32, #tpu.memory_space<vmem>>, vector<32x8xf32>
    %cst_53 = arith.constant dense<0.000000e+00> : vector<1x8xf32>
    %74 = tpu.matmul %72, %73, %cst_53 {dimension_numbers = #tpu.dot_dimension_numbers<[1], [0], [0], [1], [0, 0, 1, 1], [], []>} : vector<1x32xf32>, vector<32x8xf32>, vector<1x8xf32> -> vector<1x8xf32>
    %c0_54 = arith.constant 0 : index
    %c0_55 = arith.constant 0 : index
    %75 = vector.load %arg15[%c0_54, %c0_55] : memref<1x8xf32, #tpu.memory_space<vmem>>, vector<1x8xf32>
    %76 = arith.addf %74, %75 : vector<1x8xf32>
    %c0_56 = arith.constant 0 : index
    %c0_57 = arith.constant 0 : index
    %c0_58 = arith.constant 0 : index
    %77 = vector.load %arg16[%c0_56, %c0_57, %c0_58] : memref<1x1x8xf32, #tpu.memory_space<vmem>>, vector<1x1x8xf32>
    %78 = vector.shape_cast %77 : vector<1x1x8xf32> to vector<1x8xf32>
    %79 = vector.shape_cast %76 : vector<1x8xf32> to vector<1x1x8xf32>
    tpu.vector_store %arg16[%c0_56, %c0_57, %c0_58], %79 {strides = array<i32>} : memref<1x1x8xf32, #tpu.memory_space<vmem>>, vector<1x1x8xf32>,
    return
  }
  func.func @transform_0(%arg0: i32) -> (i32, i32, i32) {
    %c0_i32 = arith.constant 0 : i32
    %c0_i32_0 = arith.constant 0 : i32
    %c0_i32_1 = arith.constant 0 : i32
    return %arg0, %c0_i32, %c0_i32_0 : i32, i32, i32
  }
  func.func @transform_1(%arg0: i32) -> (i32, i32) {
    %c0_i32 = arith.constant 0 : i32
    %c0_i32_0 = arith.constant 0 : i32
    %c0_i32_1 = arith.constant 0 : i32
    return %c0_i32, %c0_i32_0 : i32, i32
  }
  func.func @transform_2(%arg0: i32) -> (i32, i32) {
    %c0_i32 = arith.constant 0 : i32
    %c0_i32_0 = arith.constant 0 : i32
    %c0_i32_1 = arith.constant 0 : i32
    return %c0_i32, %c0_i32_0 : i32, i32
  }
  func.func @transform_3(%arg0: i32) -> (i32, i32) {
    %c0_i32 = arith.constant 0 : i32
    %c0_i32_0 = arith.constant 0 : i32
    %c0_i32_1 = arith.constant 0 : i32
    return %c0_i32, %c0_i32_0 : i32, i32
  }
  func.func @transform_4(%arg0: i32) -> (i32, i32) {
    %c0_i32 = arith.constant 0 : i32
    %c0_i32_0 = arith.constant 0 : i32
    %c0_i32_1 = arith.constant 0 : i32
    return %c0_i32, %c0_i32_0 : i32, i32
  }
  func.func @transform_5(%arg0: i32) -> (i32, i32) {
    %c0_i32 = arith.constant 0 : i32
    %c0_i32_0 = arith.constant 0 : i32
    %c0_i32_1 = arith.constant 0 : i32
    return %c0_i32, %c0_i32_0 : i32, i32
  }
  func.func @transform_6(%arg0: i32) -> (i32, i32) {
    %c0_i32 = arith.constant 0 : i32
    %c0_i32_0 = arith.constant 0 : i32
    %c0_i32_1 = arith.constant 0 : i32
    return %c0_i32, %c0_i32_0 : i32, i32
  }
  func.func @transform_7(%arg0: i32) -> (i32, i32) {
    %c0_i32 = arith.constant 0 : i32
    %c0_i32_0 = arith.constant 0 : i32
    %c0_i32_1 = arith.constant 0 : i32
    return %c0_i32, %c0_i32_0 : i32, i32
  }
  func.func @transform_8(%arg0: i32) -> (i32, i32) {
    %c0_i32 = arith.constant 0 : i32
    %c0_i32_0 = arith.constant 0 : i32
    %c0_i32_1 = arith.constant 0 : i32
    return %c0_i32, %c0_i32_0 : i32, i32
  }
  func.func @transform_9(%arg0: i32) -> (i32, i32) {
    %c0_i32 = arith.constant 0 : i32
    %c0_i32_0 = arith.constant 0 : i32
    %c0_i32_1 = arith.constant 0 : i32
    return %c0_i32, %c0_i32_0 : i32, i32
  }
  func.func @transform_10(%arg0: i32) -> (i32, i32) {
    %c0_i32 = arith.constant 0 : i32
    %c0_i32_0 = arith.constant 0 : i32
    %c0_i32_1 = arith.constant 0 : i32
    return %c0_i32, %c0_i32_0 : i32, i32
  }
  func.func @transform_11(%arg0: i32) -> (i32, i32) {
    %c0_i32 = arith.constant 0 : i32
    %c0_i32_0 = arith.constant 0 : i32
    %c0_i32_1 = arith.constant 0 : i32
    return %c0_i32, %c0_i32_0 : i32, i32
  }
  func.func @transform_12(%arg0: i32) -> (i32, i32) {
    %c0_i32 = arith.constant 0 : i32
    %c0_i32_0 = arith.constant 0 : i32
    %c0_i32_1 = arith.constant 0 : i32
    return %c0_i32, %c0_i32_0 : i32, i32
  }
  func.func @transform_13(%arg0: i32) -> (i32, i32) {
    %c0_i32 = arith.constant 0 : i32
    %c0_i32_0 = arith.constant 0 : i32
    %c0_i32_1 = arith.constant 0 : i32
    return %c0_i32, %c0_i32_0 : i32, i32
  }
  func.func @transform_14(%arg0: i32) -> (i32, i32) {
    %c0_i32 = arith.constant 0 : i32
    %c0_i32_0 = arith.constant 0 : i32
    %c0_i32_1 = arith.constant 0 : i32
    return %c0_i32, %c0_i32_0 : i32, i32
  }
  func.func @transform_15(%arg0: i32) -> (i32, i32, i32) {
    %c0_i32 = arith.constant 0 : i32
    %c0_i32_0 = arith.constant 0 : i32
    %c0_i32_1 = arith.constant 0 : i32
    return %arg0, %c0_i32, %c0_i32_0 : i32, i32, i32
  }
}

</mosaic_0001>

<llo_original>
// kernel: prop_state_forward.1
$region0: #{prop_state_forward.1}
  #allocation0 [shape = 'u32[]', space=smem, size = 0x4, offset = 0x4, fixed_abs, tag = 'smem constant byte address 0x4 - core index']
  #allocation1 [shape = 'u32[72,128]{1,0:T(1,128)}', space=vmem, size = 0x9000, scoped, tag = 'internal scratch']
  #allocation2 [shape = 'f32[8,72]{1,0:T(8,128)}', space=vmem, size = 0x1000, scoped, tag = 'scratch operand']
  %s0 = inlined_call_operand.vmem [shape: f32[2,36,72], index: 0, kind: input, shape index: {}]
  %s1 = inlined_call_operand.vmem [shape: f32[8,36], index: 1, kind: input, shape index: {}]
  %s2 = inlined_call_operand.vmem [shape: f32[8,1], index: 2, kind: input, shape index: {}]
  %s3 = inlined_call_operand.vmem [shape: f32[8,72], index: 3, kind: input, shape index: {}]
  %s4 = inlined_call_operand.vmem [shape: f32[8,1], index: 4, kind: input, shape index: {}]
  %s5 = inlined_call_operand.vmem [shape: f32[448,32], index: 5, kind: input, shape index: {}]
  %s6 = inlined_call_operand.vmem [shape: f32[1,32], index: 6, kind: input, shape index: {}]
  %s7 = inlined_call_operand.vmem [shape: f32[1,32], index: 7, kind: input, shape index: {}]
  %s8 = inlined_call_operand.vmem [shape: f32[1,32], index: 8, kind: input, shape index: {}]
  %s9 = inlined_call_operand.vmem [shape: f32[32,32], index: 9, kind: input, shape index: {}]
  %s10 = inlined_call_operand.vmem [shape: f32[1,32], index: 10, kind: input, shape index: {}]
  %s11 = inlined_call_operand.vmem [shape: f32[32,32], index: 11, kind: input, shape index: {}]
  %s12 = inlined_call_operand.vmem [shape: f32[1,32], index: 12, kind: input, shape index: {}]
  %s13 = inlined_call_operand.vmem [shape: f32[32,8], index: 13, kind: input, shape index: {}]
  %s14 = inlined_call_operand.vmem [shape: f32[1,8], index: 14, kind: input, shape index: {}]
  %s15 = inlined_call_operand.hbm [shape: f32[2,1,8], index: 15, kind: output, shape index: {}]
  %s16 = sld [smem:[#allocation0]]
  $region93: #{prop_state_forward.1} parent=0
    _
  %s18 = ssub.s32 1, %s16
  %s19 = scalar_select 0, %s18, %s16
  $region1: #{prop_state_forward.1} parent=0
    #allocation3 [shape = 'u8[1024]{0}', space=vmem, size = 0x400, scoped, tag = 'output window, operand 0']
    #allocation4 [shape = 's32[2]{0}', space=sflag, size = 0x8, scoped, tag = 'scoped memory for prop_state_forward.1']
    %20 = vsyncpa [#allocation4], 0
    %s21 = scalar_lea.sflag [#allocation4], 1
    %22 = vsyncpa %s21, 0
    loop: start=0, step=1, limit=4
    $region2: #{prop_state_forward.1} parent=1 // loop_pre_header
      _
    $region3: #{prop_state_forward.1} parent=1 // loop_header
      %s24 = sphi 0, %s28
      %p25 = scmp.ge.s32.totalorder %s24, 4
      %s34 = sphi 0, %s36
      %s37 = sphi 0, %s34
      %s38 = sphi 0, %s37
      %s54 = sphi 0, %s38
      %s58 = sphi 0, %s58
      %s60 = sphi 0, %s58
      %s61 = sphi 0, %s60
      %s75 = sphi 0, %s61
      %s79 = sphi 0, %s79
      %s81 = sphi 0, %s79
      %s82 = sphi 0, %s81
      %s96 = sphi 0, %s82
      %s100 = sphi 0, %s100
      %s102 = sphi 0, %s100
      %s103 = sphi 0, %s102
      %s117 = sphi 0, %s103
      %s121 = sphi 0, %s121
      %s123 = sphi 0, %s121
      %s124 = sphi 0, %s123
      %s138 = sphi 0, %s124
      %s142 = sphi 0, %s142
      %s144 = sphi 0, %s142
      %s145 = sphi 0, %s144
      %s159 = sphi 0, %s145
      %s163 = sphi 0, %s163
      %s165 = sphi 0, %s163
      %s166 = sphi 0, %s165
      %s180 = sphi 0, %s166
      %s184 = sphi 0, %s184
      %s186 = sphi 0, %s184
      %s187 = sphi 0, %s186
      %s201 = sphi 0, %s187
      %s205 = sphi 0, %s205
      %s207 = sphi 0, %s205
      %s208 = sphi 0, %s207
      %s222 = sphi 0, %s208
      %s226 = sphi 0, %s226
      %s228 = sphi 0, %s226
      %s229 = sphi 0, %s228
      %s243 = sphi 0, %s229
      %s247 = sphi 0, %s247
      %s249 = sphi 0, %s247
      %s250 = sphi 0, %s249
      %s264 = sphi 0, %s250
      %s268 = sphi 0, %s268
      %s270 = sphi 0, %s268
      %s271 = sphi 0, %s270
      %s285 = sphi 0, %s271
      %s289 = sphi 0, %s289
      %s291 = sphi 0, %s289
      %s292 = sphi 0, %s291
      %s306 = sphi 0, %s292
      %s310 = sphi 0, %s310
      %s312 = sphi 0, %s310
      %s313 = sphi 0, %s312
      %s327 = sphi 0, %s313
      %s331 = sphi 0, %s331
      %s333 = sphi 0, %s331
      %s334 = sphi 0, %s333
      %s348 = sphi 0, %s334
      %s354 = sphi 0, %s356
      %s357 = sphi 0, %s354
      %s358 = sphi 0, %s357
      %s374 = sphi 0, %s358
    $region4: #{prop_state_forward.1} parent=1 // loop_header_branch
      %27 = sbr.rel (%p25) target = $region8
    $region5: #{prop_state_forward.1} parent=1 // loop_body
      %s29 = ssub.s32 %s24, 1
      %s30 = ssub.s32 %s24, 2
      %s31 = sadd.s32 %s24, 1
      %s32 = ssub.s32 %s24, %s31
      %p33 = scmp.eq.s32.totalorder %s32, 0
      %s35 = sadd.s32 %s34, 1
      %s36 = scalar_select %p33, %s34, %s35
      %p39 = pneg %p33
      %p40 = scmp.eq.s32.totalorder %s24, 1
      %p41 = por %p39, %p40
      %p42 = scmp.ne.s32.totalorder %s34, %s37
      %p43 = scmp.eq.s32.totalorder %s24, 0
      %p44 = por %p42, %p43
      %p45 = scmp.ne.s32.totalorder %s34, %s37
      %p46 = scmp.eq.s32.totalorder %s29, 1
      %p47 = por %p45, %p46
      %p48 = scmp.ne.s32.totalorder %s37, %s38
      %p49 = scmp.eq.s32.totalorder %s29, 0
      %p50 = por %p48, %p49
      %p51 = scmp.ne.s32.totalorder %s37, %s38
      %p52 = scmp.eq.s32.totalorder %s30, 1
      %p53 = por %p51, %p52
      %p55 = scmp.ne.s32.totalorder %s38, %s54
      %p56 = scmp.eq.s32.totalorder %s30, 0
      %p57 = por %p55, %p56
      %s59 = sadd.s32 %s58, 1
      %p62 = scmp.eq.s32.totalorder %s24, 1
      %p63 = scmp.ne.s32.totalorder %s58, %s60
      %p64 = scmp.eq.s32.totalorder %s24, 0
      %p65 = por %p63, %p64
      %p66 = scmp.ne.s32.totalorder %s58, %s60
      %p67 = scmp.eq.s32.totalorder %s29, 1
      %p68 = por %p66, %p67
      %p69 = scmp.ne.s32.totalorder %s60, %s61
      %p70 = scmp.eq.s32.totalorder %s29, 0
      %p71 = por %p69, %p70
      %p72 = scmp.ne.s32.totalorder %s60, %s61
      %p73 = scmp.eq.s32.totalorder %s30, 1
      %p74 = por %p72, %p73
      %p76 = scmp.ne.s32.totalorder %s61, %s75
      %p77 = scmp.eq.s32.totalorder %s30, 0
      %p78 = por %p76, %p77
      %s80 = sadd.s32 %s79, 1
      %p83 = scmp.eq.s32.totalorder %s24, 1
      %p84 = scmp.ne.s32.totalorder %s79, %s81
      %p85 = scmp.eq.s32.totalorder %s24, 0
      %p86 = por %p84, %p85
      %p87 = scmp.ne.s32.totalorder %s79, %s81
      %p88 = scmp.eq.s32.totalorder %s29, 1
      %p89 = por %p87, %p88
      %p90 = scmp.ne.s32.totalorder %s81, %s82
      %p91 = scmp.eq.s32.totalorder %s29, 0
      %p92 = por %p90, %p91
      %p93 = scmp.ne.s32.totalorder %s81, %s82
      %p94 = scmp.eq.s32.totalorder %s30, 1
      %p95 = por %p93, %p94
      %p97 = scmp.ne.s32.totalorder %s82, %s96
      %p98 = scmp.eq.s32.totalorder %s30, 0
      %p99 = por %p97, %p98
      %s101 = sadd.s32 %s100, 1
      %p104 = scmp.eq.s32.totalorder %s24, 1
      %p105 = scmp.ne.s32.totalorder %s100, %s102
      %p106 = scmp.eq.s32.totalorder %s24, 0
      %p107 = por %p105, %p106
      %p108 = scmp.ne.s32.totalorder %s100, %s102
      %p109 = scmp.eq.s32.totalorder %s29, 1
      %p110 = por %p108, %p109
      %p111 = scmp.ne.s32.totalorder %s102, %s103
      %p112 = scmp.eq.s32.totalorder %s29, 0
      %p113 = por %p111, %p112
      %p114 = scmp.ne.s32.totalorder %s102, %s103
      %p115 = scmp.eq.s32.totalorder %s30, 1
      %p116 = por %p114, %p115
      %p118 = scmp.ne.s32.totalorder %s103, %s117
      %p119 = scmp.eq.s32.totalorder %s30, 0
      %p120 = por %p118, %p119
      %s122 = sadd.s32 %s121, 1
      %p125 = scmp.eq.s32.totalorder %s24, 1
      %p126 = scmp.ne.s32.totalorder %s121, %s123
      %p127 = scmp.eq.s32.totalorder %s24, 0
      %p128 = por %p126, %p127
      %p129 = scmp.ne.s32.totalorder %s121, %s123
      %p130 = scmp.eq.s32.totalorder %s29, 1
      %p131 = por %p129, %p130
      %p132 = scmp.ne.s32.totalorder %s123, %s124
      %p133 = scmp.eq.s32.totalorder %s29, 0
      %p134 = por %p132, %p133
      %p135 = scmp.ne.s32.totalorder %s123, %s124
      %p136 = scmp.eq.s32.totalorder %s30, 1
      %p137 = por %p135, %p136
      %p139 = scmp.ne.s32.totalorder %s124, %s138
      %p140 = scmp.eq.s32.totalorder %s30, 0
      %p141 = por %p139, %p140
      %s143 = sadd.s32 %s142, 1
      %p146 = scmp.eq.s32.totalorder %s24, 1
      %p147 = scmp.ne.s32.totalorder %s142, %s144
      %p148 = scmp.eq.s32.totalorder %s24, 0
      %p149 = por %p147, %p148
      %p150 = scmp.ne.s32.totalorder %s142, %s144
      %p151 = scmp.eq.s32.totalorder %s29, 1
      %p152 = por %p150, %p151
      %p153 = scmp.ne.s32.totalorder %s144, %s145
      %p154 = scmp.eq.s32.totalorder %s29, 0
      %p155 = por %p153, %p154
      %p156 = scmp.ne.s32.totalorder %s144, %s145
      %p157 = scmp.eq.s32.totalorder %s30, 1
      %p158 = por %p156, %p157
      %p160 = scmp.ne.s32.totalorder %s145, %s159
      %p161 = scmp.eq.s32.totalorder %s30, 0
      %p162 = por %p160, %p161
      %s164 = sadd.s32 %s163, 1
      %p167 = scmp.eq.s32.totalorder %s24, 1
      %p168 = scmp.ne.s32.totalorder %s163, %s165
      %p169 = scmp.eq.s32.totalorder %s24, 0
      %p170 = por %p168, %p169
      %p171 = scmp.ne.s32.totalorder %s163, %s165
      %p172 = scmp.eq.s32.totalorder %s29, 1
      %p173 = por %p171, %p172
      %p174 = scmp.ne.s32.totalorder %s165, %s166
      %p175 = scmp.eq.s32.totalorder %s29, 0
      %p176 = por %p174, %p175
      %p177 = scmp.ne.s32.totalorder %s165, %s166
      %p178 = scmp.eq.s32.totalorder %s30, 1
      %p179 = por %p177, %p178
      %p181 = scmp.ne.s32.totalorder %s166, %s180
      %p182 = scmp.eq.s32.totalorder %s30, 0
      %p183 = por %p181, %p182
      %s185 = sadd.s32 %s184, 1
      %p188 = scmp.eq.s32.totalorder %s24, 1
      %p189 = scmp.ne.s32.totalorder %s184, %s186
      %p190 = scmp.eq.s32.totalorder %s24, 0
      %p191 = por %p189, %p190
      %p192 = scmp.ne.s32.totalorder %s184, %s186
      %p193 = scmp.eq.s32.totalorder %s29, 1
      %p194 = por %p192, %p193
      %p195 = scmp.ne.s32.totalorder %s186, %s187
      %p196 = scmp.eq.s32.totalorder %s29, 0
      %p197 = por %p195, %p196
      %p198 = scmp.ne.s32.totalorder %s186, %s187
      %p199 = scmp.eq.s32.totalorder %s30, 1
      %p200 = por %p198, %p199
      %p202 = scmp.ne.s32.totalorder %s187, %s201
      %p203 = scmp.eq.s32.totalorder %s30, 0
      %p204 = por %p202, %p203
      %s206 = sadd.s32 %s205, 1
      %p209 = scmp.eq.s32.totalorder %s24, 1
      %p210 = scmp.ne.s32.totalorder %s205, %s207
      %p211 = scmp.eq.s32.totalorder %s24, 0
      %p212 = por %p210, %p211
      %p213 = scmp.ne.s32.totalorder %s205, %s207
      %p214 = scmp.eq.s32.totalorder %s29, 1
      %p215 = por %p213, %p214
      %p216 = scmp.ne.s32.totalorder %s207, %s208
      %p217 = scmp.eq.s32.totalorder %s29, 0
      %p218 = por %p216, %p217
      %p219 = scmp.ne.s32.totalorder %s207, %s208
      %p220 = scmp.eq.s32.totalorder %s30, 1
      %p221 = por %p219, %p220
      %p223 = scmp.ne.s32.totalorder %s208, %s222
      %p224 = scmp.eq.s32.totalorder %s30, 0
      %p225 = por %p223, %p224
      %s227 = sadd.s32 %s226, 1
      %p230 = scmp.eq.s32.totalorder %s24, 1
      %p231 = scmp.ne.s32.totalorder %s226, %s228
      %p232 = scmp.eq.s32.totalorder %s24, 0
      %p233 = por %p231, %p232
      %p234 = scmp.ne.s32.totalorder %s226, %s228
      %p235 = scmp.eq.s32.totalorder %s29, 1
      %p236 = por %p234, %p235
      %p237 = scmp.ne.s32.totalorder %s228, %s229
      %p238 = scmp.eq.s32.totalorder %s29, 0
      %p239 = por %p237, %p238
      %p240 = scmp.ne.s32.totalorder %s228, %s229
      %p241 = scmp.eq.s32.totalorder %s30, 1
      %p242 = por %p240, %p241
      %p244 = scmp.ne.s32.totalorder %s229, %s243
      %p245 = scmp.eq.s32.totalorder %s30, 0
      %p246 = por %p244, %p245
      %s248 = sadd.s32 %s247, 1
      %p251 = scmp.eq.s32.totalorder %s24, 1
      %p252 = scmp.ne.s32.totalorder %s247, %s249
      %p253 = scmp.eq.s32.totalorder %s24, 0
      %p254 = por %p252, %p253
      %p255 = scmp.ne.s32.totalorder %s247, %s249
      %p256 = scmp.eq.s32.totalorder %s29, 1
      %p257 = por %p255, %p256
      %p258 = scmp.ne.s32.totalorder %s249, %s250
      %p259 = scmp.eq.s32.totalorder %s29, 0
      %p260 = por %p258, %p259
      %p261 = scmp.ne.s32.totalorder %s249, %s250
      %p262 = scmp.eq.s32.totalorder %s30, 1
      %p263 = por %p261, %p262
      %p265 = scmp.ne.s32.totalorder %s250, %s264
      %p266 = scmp.eq.s32.totalorder %s30, 0
      %p267 = por %p265, %p266
      %s269 = sadd.s32 %s268, 1
      %p272 = scmp.eq.s32.totalorder %s24, 1
      %p273 = scmp.ne.s32.totalorder %s268, %s270
      %p274 = scmp.eq.s32.totalorder %s24, 0
      %p275 = por %p273, %p274
      %p276 = scmp.ne.s32.totalorder %s268, %s270
      %p277 = scmp.eq.s32.totalorder %s29, 1
      %p278 = por %p276, %p277
      %p279 = scmp.ne.s32.totalorder %s270, %s271
      %p280 = scmp.eq.s32.totalorder %s29, 0
      %p281 = por %p279, %p280
      %p282 = scmp.ne.s32.totalorder %s270, %s271
      %p283 = scmp.eq.s32.totalorder %s30, 1
      %p284 = por %p282, %p283
      %p286 = scmp.ne.s32.totalorder %s271, %s285
      %p287 = scmp.eq.s32.totalorder %s30, 0
      %p288 = por %p286, %p287
      %s290 = sadd.s32 %s289, 1
      %p293 = scmp.eq.s32.totalorder %s24, 1
      %p294 = scmp.ne.s32.totalorder %s289, %s291
      %p295 = scmp.eq.s32.totalorder %s24, 0
      %p296 = por %p294, %p295
      %p297 = scmp.ne.s32.totalorder %s289, %s291
      %p298 = scmp.eq.s32.totalorder %s29, 1
      %p299 = por %p297, %p298
      %p300 = scmp.ne.s32.totalorder %s291, %s292
      %p301 = scmp.eq.s32.totalorder %s29, 0
      %p302 = por %p300, %p301
      %p303 = scmp.ne.s32.totalorder %s291, %s292
      %p304 = scmp.eq.s32.totalorder %s30, 1
      %p305 = por %p303, %p304
      %p307 = scmp.ne.s32.totalorder %s292, %s306
      %p308 = scmp.eq.s32.totalorder %s30, 0
      %p309 = por %p307, %p308
      %s311 = sadd.s32 %s310, 1
      %p314 = scmp.eq.s32.totalorder %s24, 1
      %p315 = scmp.ne.s32.totalorder %s310, %s312
      %p316 = scmp.eq.s32.totalorder %s24, 0
      %p317 = por %p315, %p316
      %p318 = scmp.ne.s32.totalorder %s310, %s312
      %p319 = scmp.eq.s32.totalorder %s29, 1
      %p320 = por %p318, %p319
      %p321 = scmp.ne.s32.totalorder %s312, %s313
      %p322 = scmp.eq.s32.totalorder %s29, 0
      %p323 = por %p321, %p322
      %p324 = scmp.ne.s32.totalorder %s312, %s313
      %p325 = scmp.eq.s32.totalorder %s30, 1
      %p326 = por %p324, %p325
      %p328 = scmp.ne.s32.totalorder %s313, %s327
      %p329 = scmp.eq.s32.totalorder %s30, 0
      %p330 = por %p328, %p329
      %s332 = sadd.s32 %s331, 1
      %p335 = scmp.eq.s32.totalorder %s24, 1
      %p336 = scmp.ne.s32.totalorder %s331, %s333
      %p337 = scmp.eq.s32.totalorder %s24, 0
      %p338 = por %p336, %p337
      %p339 = scmp.ne.s32.totalorder %s331, %s333
      %p340 = scmp.eq.s32.totalorder %s29, 1
      %p341 = por %p339, %p340
      %p342 = scmp.ne.s32.totalorder %s333, %s334
      %p343 = scmp.eq.s32.totalorder %s29, 0
      %p344 = por %p342, %p343
      %p345 = scmp.ne.s32.totalorder %s333, %s334
      %p346 = scmp.eq.s32.totalorder %s30, 1
      %p347 = por %p345, %p346
      %p349 = scmp.ne.s32.totalorder %s334, %s348
      %p350 = scmp.eq.s32.totalorder %s30, 0
      %p351 = por %p349, %p350
      %s352 = ssub.s32 %s24, %s31
      %p353 = scmp.eq.s32.totalorder %s352, 0
      %s355 = sadd.s32 %s354, 1
      %s356 = scalar_select %p353, %s354, %s355
      %p359 = pneg %p353
      %p360 = scmp.eq.s32.totalorder %s24, 1
      %p361 = por %p359, %p360
      %p362 = scmp.ne.s32.totalorder %s354, %s357
      %p363 = scmp.eq.s32.totalorder %s24, 0
      %p364 = por %p362, %p363
      %p365 = scmp.ne.s32.totalorder %s354, %s357
      %p366 = scmp.eq.s32.totalorder %s29, 1
      %p367 = por %p365, %p366
      %p368 = scmp.ne.s32.totalorder %s357, %s358
      %p369 = scmp.eq.s32.totalorder %s29, 0
      %p370 = por %p368, %p369
      %p371 = scmp.ne.s32.totalorder %s357, %s358
      %p372 = scmp.eq.s32.totalorder %s30, 1
      %p373 = por %p371, %p372
      %p375 = scmp.ne.s32.totalorder %s358, %s374
      %p376 = scmp.eq.s32.totalorder %s30, 0
      %p377 = por %p375, %p376
      %p378 = scmp.le.s32.totalorder 1, %s24
      %p379 = scmp.lt.s32.totalorder %s24, 3
      %p380 = pnand %p378, %p379
      %p381 = pneg %p380
      // Predicated region
      $region9: #{prop_state_forward.1} parent=5 // pred_check
        _
      $region10: #{prop_state_forward.1} parent=5 // pred_check_branch
        %383 = sbr.rel (%p380) target = $region12
      $region11: #{prop_state_forward.1} parent=5 // pred_region
        %s384 = ssub.s32 %s24, 1
        // Predicated region
        $region13: #{prop_state_forward.1} parent=11 // pred_check
          %p385 = pneg %p71
        $region14: #{prop_state_forward.1} parent=11 // pred_check_branch
          %387 = sbr.rel (%p385) target = $region16
        $region15: #{prop_state_forward.1} parent=11 // pred_region
          _
        $region16: #{prop_state_forward.1} parent=11 // pred_fallthru
          _
        // Predicated region
        $region17: #{prop_state_forward.1} parent=11 // pred_check
          %p388 = pneg %p92
        $region18: #{prop_state_forward.1} parent=11 // pred_check_branch
          %390 = sbr.rel (%p388) target = $region20
        $region19: #{prop_state_forward.1} parent=11 // pred_region
          _
        $region20: #{prop_state_forward.1} parent=11 // pred_fallthru
          _
        // Predicated region
        $region21: #{prop_state_forward.1} parent=11 // pred_check
          %p391 = pneg %p113
        $region22: #{prop_state_forward.1} parent=11 // pred_check_branch
          %393 = sbr.rel (%p391) target = $region24
        $region23: #{prop_state_forward.1} parent=11 // pred_region
          _
        $region24: #{prop_state_forward.1} parent=11 // pred_fallthru
          _
        // Predicated region
        $region25: #{prop_state_forward.1} parent=11 // pred_check
          %p394 = pneg %p134
        $region26: #{prop_state_forward.1} parent=11 // pred_check_branch
          %396 = sbr.rel (%p394) target = $region28
        $region27: #{prop_state_forward.1} parent=11 // pred_region
          _
        $region28: #{prop_state_forward.1} parent=11 // pred_fallthru
          _
        // Predicated region
        $region29: #{prop_state_forward.1} parent=11 // pred_check
          %p397 = pneg %p155
        $region30: #{prop_state_forward.1} parent=11 // pred_check_branch
          %399 = sbr.rel (%p397) target = $region32
        $region31: #{prop_state_forward.1} parent=11 // pred_region
          _
        $region32: #{prop_state_forward.1} parent=11 // pred_fallthru
          _
        // Predicated region
        $region33: #{prop_state_forward.1} parent=11 // pred_check
          %p400 = pneg %p176
        $region34: #{prop_state_forward.1} parent=11 // pred_check_branch
          %402 = sbr.rel (%p400) target = $region36
        $region35: #{prop_state_forward.1} parent=11 // pred_region
          _
        $region36: #{prop_state_forward.1} parent=11 // pred_fallthru
          _
        // Predicated region
        $region37: #{prop_state_forward.1} parent=11 // pred_check
          %p403 = pneg %p197
        $region38: #{prop_state_forward.1} parent=11 // pred_check_branch
          %405 = sbr.rel (%p403) target = $region40
        $region39: #{prop_state_forward.1} parent=11 // pred_region
          _
        $region40: #{prop_state_forward.1} parent=11 // pred_fallthru
          _
        // Predicated region
        $region41: #{prop_state_forward.1} parent=11 // pred_check
          %p406 = pneg %p218
        $region42: #{prop_state_forward.1} parent=11 // pred_check_branch
          %408 = sbr.rel (%p406) target = $region44
        $region43: #{prop_state_forward.1} parent=11 // pred_region
          _
        $region44: #{prop_state_forward.1} parent=11 // pred_fallthru
          _
        // Predicated region
        $region45: #{prop_state_forward.1} parent=11 // pred_check
          %p409 = pneg %p239
        $region46: #{prop_state_forward.1} parent=11 // pred_check_branch
          %411 = sbr.rel (%p409) target = $region48
        $region47: #{prop_state_forward.1} parent=11 // pred_region
          _
        $region48: #{prop_state_forward.1} parent=11 // pred_fallthru
          _
        // Predicated region
        $region49: #{prop_state_forward.1} parent=11 // pred_check
          %p412 = pneg %p260
        $region50: #{prop_state_forward.1} parent=11 // pred_check_branch
          %414 = sbr.rel (%p412) target = $region52
        $region51: #{prop_state_forward.1} parent=11 // pred_region
          _
        $region52: #{prop_state_forward.1} parent=11 // pred_fallthru
          _
        // Predicated region
        $region53: #{prop_state_forward.1} parent=11 // pred_check
          %p415 = pneg %p281
        $region54: #{prop_state_forward.1} parent=11 // pred_check_branch
          %417 = sbr.rel (%p415) target = $region56
        $region55: #{prop_state_forward.1} parent=11 // pred_region
          _
        $region56: #{prop_state_forward.1} parent=11 // pred_fallthru
          _
        // Predicated region
        $region57: #{prop_state_forward.1} parent=11 // pred_check
          %p418 = pneg %p302
        $region58: #{prop_state_forward.1} parent=11 // pred_check_branch
          %420 = sbr.rel (%p418) target = $region60
        $region59: #{prop_state_forward.1} parent=11 // pred_region
          _
        $region60: #{prop_state_forward.1} parent=11 // pred_fallthru
          _
        // Predicated region
        $region61: #{prop_state_forward.1} parent=11 // pred_check
          %p421 = pneg %p323
        $region62: #{prop_state_forward.1} parent=11 // pred_check_branch
          %423 = sbr.rel (%p421) target = $region64
        $region63: #{prop_state_forward.1} parent=11 // pred_region
          _
        $region64: #{prop_state_forward.1} parent=11 // pred_fallthru
          _
        // Predicated region
        $region65: #{prop_state_forward.1} parent=11 // pred_check
          %p424 = pneg %p344
        $region66: #{prop_state_forward.1} parent=11 // pred_check_branch
          %426 = sbr.rel (%p424) target = $region68
        $region67: #{prop_state_forward.1} parent=11 // pred_region
          _
        $region68: #{prop_state_forward.1} parent=11 // pred_fallthru
          _
      $region12: #{prop_state_forward.1} parent=5 // pred_fallthru
        _
      %p427 = scmp.lt.s32.totalorder %s24, 2
      // Predicated region
      $region69: #{prop_state_forward.1} parent=5 // pred_check
        %p428 = pneg %p427
      $region70: #{prop_state_forward.1} parent=5 // pred_check_branch
        %430 = sbr.rel (%p428) target = $region72
      $region71: #{prop_state_forward.1} parent=5 // pred_region
        // Predicated region
        $region73: #{prop_state_forward.1} parent=71 // pred_check
          %p431 = pneg %p44
        $region74: #{prop_state_forward.1} parent=71 // pred_check_branch
          %433 = sbr.rel (%p431) target = $region76
        $region75: #{prop_state_forward.1} parent=71 // pred_region
          %p434 = scmp.lt.s32.totalorder %s24, 1
          %s435 = scalar_select %p434, %s24, 1
          %s436 = smul.addr %s435, 5
          %s437 = smul.addr %s436, 8
          %s438 = scalar_lea.vmem %s0, %s437
        $region76: #{prop_state_forward.1} parent=71 // pred_fallthru
          _
      $region72: #{prop_state_forward.1} parent=5 // pred_fallthru
        _
      %p439 = scmp.le.s32.totalorder 1, %s24
      %p440 = scmp.lt.s32.totalorder %s24, 3
      %p441 = pnand %p439, %p440
      %p442 = pneg %p441
      // Predicated region
      $region77: #{prop_state_forward.1} parent=5 // pred_check
        _
      $region78: #{prop_state_forward.1} parent=5 // pred_check_branch
        %444 = sbr.rel (%p441) target = $region80
      $region79: #{prop_state_forward.1} parent=5 // pred_region
        %s445 = ssub.s32 %s24, 1
        %p446 = scmp.lt.s32.totalorder %s29, 1
        %s447 = scalar_select %p446, %s29, 1
        %s448 = smul.addr %s447, 5
        %s449 = smul.addr %s448, 8
        %s450 = scalar_lea.vmem %s0, %s449
        %p451 = pneg %p50
        %p452 = pneg %p47
        %p453 = pneg %p71
        %p454 = pneg %p68
        %p455 = pneg %p92
        %p456 = pneg %p89
        %p457 = pneg %p113
        %p458 = pneg %p110
        %p459 = pneg %p134
        %p460 = pneg %p131
        %p461 = pneg %p155
        %p462 = pneg %p152
        %p463 = pneg %p176
        %p464 = pneg %p173
        %p465 = pneg %p197
        %p466 = pneg %p194
        %p467 = pneg %p218
        %p468 = pneg %p215
        %p469 = pneg %p239
        %p470 = pneg %p236
        %p471 = pneg %p260
        %p472 = pneg %p257
        %p473 = pneg %p281
        %p474 = pneg %p278
        %p475 = pneg %p302
        %p476 = pneg %p299
        %p477 = pneg %p323
        %p478 = pneg %p320
        %p479 = pneg %p344
        %p480 = pneg %p341
        %p481 = pneg %p370
        %p482 = pneg %p367
        %s483 = sand.u32 %s357, 1
        %s484 = scalar_lea.sflag [#allocation4], %s483
        %s485 = sand.u32 %s357, 1
        %s486 = scalar_lea.vmem [#allocation3], %s485
        %p487 = scmp.lt.s32.totalorder %s29, 1
        %s488 = scalar_select %p487, %s29, 1
        %s489 = smul.addr %s488, 5
        %s490 = smul.addr %s489, 8
        %s491 = scalar_lea.vmem %s0, %s490
        %v492 = vld [vmem:[%s1] sm:$0xff]
        %v493 = vld [vmem:[%s491] sm:$0xff]
        %v494 = vld [vmem:[%s491 + $0x8] sm:$0xff]
        %v495 = vld [vmem:[%s491 + $0x10] sm:$0xff]
        %v496 = vld [vmem:[%s491 + $0x18] sm:$0xff]
        %v497 = vld [vmem:[%s491 + $0x20] sm:$0xf]
        %v498 = vld [vmem:[%s2] sm:$0xff]
        %500 = vset.pattern.permute.xlu0 0
        %501 = vperm.xlu0 %500, %v498
        %v502 = vpop.permute.xlu0 %501
        %vm504 = vcmask 293888
        %v506 = vsel %vm504, %v492, 0
        %vm508 = vcmask 1043456
        %v510 = vsel %vm508, %v497, 0
        %512 = vmatpush.msra.mxu0 0.0
        %513 = vmatpush.msra.mxu0 0.0
        %514 = vmatpush.msra.mxu0 0.0
        %515 = vmatpush.msra.mxu0 0.0
        %516 = vmatpush.msra.mxu0 0.0
        %517 = vmatpush.msra.mxu0 0.0
        %518 = vmatpush.msra.mxu0 0.0
        %519 = vmatpush.msra.mxu0 0.0
        %520 = vmatpush.msra.mxu0 0.0
        %521 = vmatpush.msra.mxu0 0.0
        %522 = vmatpush.msra.mxu0 0.0
        %523 = vmatpush.msra.mxu0 %v510
        %524 = vmatpush.msra.mxu0 %v496
        %525 = vmatpush.msra.mxu0 %v495
        %526 = vmatpush.msra.mxu0 %v494
        %527 = vmatpush.msra.mxu0 %v493
        %528 = vmatmul.f32.gmra.mxu0 %v506
        %v529 = vpop.f32.mrf.mxu0
        %v530 = vadd.f32 %v502, %v529
        %531 = vdwg.mxu0
        %v532 = vmax.f32 %v530, 0.0
        %vm533 = vcmask 588800
        %534 = vst.msk [vmem:[#allocation2] sm:$0xff] %vm533, %v532
        %v535 = vld [vmem:[#allocation2] sm:$0xff]
        %537 = vrot.lane.b32.xlu0 %v535, 127
        %v538 = vpop.permute.xlu0 %537
        %540 = vrot.lane.b32.xlu0 %v535, 126
        %v541 = vpop.permute.xlu0 %540
        %543 = vrot.lane.b32.xlu0 %v535, 121
        %v544 = vpop.permute.xlu0 %543
        %546 = vrot.lane.b32.xlu0 %v535, 120
        %v547 = vpop.permute.xlu0 %546
        %549 = vrot.lane.b32.xlu0 %v535, 119
        %v550 = vpop.permute.xlu0 %549
        %552 = vrot.lane.b32.xlu0 %v535, 114
        %v553 = vpop.permute.xlu0 %552
        %555 = vrot.lane.b32.xlu0 %v535, 113
        %v556 = vpop.permute.xlu0 %555
        %558 = vrot.lane.b32.xlu0 %v535, 112
        %v559 = vpop.permute.xlu0 %558
        %v561 = vld [vmem:[%s3] sm:$0xff]
        %v562 = vld [vmem:[%s4] sm:$0xff]
        %564 = vset.pattern.permute.xlu0 0
        %565 = vperm.xlu0 %564, %v562
        %v566 = vpop.permute.xlu0 %565
        %v569 = vsel %vm533, %v561, 0
        %571 = vmatpush.msra.mxu0 0.0
        %572 = vmatpush.msra.mxu0 0.0
        %573 = vmatpush.msra.mxu0 0.0
        %574 = vmatpush.msra.mxu0 0.0
        %575 = vmatpush.msra.mxu0 0.0
        %576 = vmatpush.msra.mxu0 0.0
        %577 = vmatpush.msra.mxu0 0.0
        %578 = vmatpush.msra.mxu0 %v559
        %579 = vmatpush.msra.mxu0 %v556
        %580 = vmatpush.msra.mxu0 %v553
        %581 = vmatpush.msra.mxu0 %v550
        %582 = vmatpush.msra.mxu0 %v547
        %583 = vmatpush.msra.mxu0 %v544
        %584 = vmatpush.msra.mxu0 %v541
        %585 = vmatpush.msra.mxu0 %v538
        %586 = vmatpush.msra.mxu0 %v535
        %587 = vmatmul.f32.gmra.mxu0 %v569
        %v588 = vpop.f32.mrf.mxu0
        %v589 = vadd.f32 %v566, %v588
        %590 = vdwg.mxu0
        %v591 = vmax.f32 %v589, 0.0
        %v593 = vrot.slane %v591, 1
        %594 = vrot.lane.b32.xlu0 %v593, 56
        %v595 = vpop.permute.xlu0 %594
        %v597 = vrot.slane %v591, 2
        %598 = vrot.lane.b32.xlu0 %v597, 112
        %v599 = vpop.permute.xlu0 %598
        %v601 = vrot.slane %v591, 3
        %602 = vrot.lane.b32.xlu0 %v601, 40
        %v603 = vpop.permute.xlu0 %602
        %v605 = vrot.slane %v591, 4
        %606 = vrot.lane.b32.xlu0 %v605, 96
        %v607 = vpop.permute.xlu0 %606
        %v609 = vrot.slane %v591, 5
        %610 = vrot.lane.b32.xlu0 %v609, 24
        %v611 = vpop.permute.xlu0 %610
        %v613 = vrot.slane %v591, 6
        %614 = vrot.lane.b32.xlu0 %v613, 80
        %v615 = vpop.permute.xlu0 %614
        %v617 = vrot.slane %v591, 7
        %618 = vrot.lane.b32.xlu0 %v617, 8
        %v619 = vpop.permute.xlu0 %618
        %vm621 = vcmask 457728
        %v622 = vsel %vm621, %v591, %v595
        %vm623 = vcmask 916480
        %v624 = vsel %vm623, %v622, %v599
        %vm625 = vcmask 326656
        %v626 = vsel %vm625, %v599, %v603
        %vm627 = vcmask 785408
        %v628 = vsel %vm627, %v626, %v607
        %vm629 = vcmask 195584
        %v630 = vsel %vm629, %v607, %v611
        %vm631 = vcmask 654336
        %v632 = vsel %vm631, %v630, %v615
        %vm633 = vcmask 64512
        %v634 = vsel %vm633, %v615, %v619
        %v635 = vld [vmem:[%s5] sm:$0xff]
        %v636 = vld [vmem:[%s5 + $0x8] sm:$0xff]
        %v637 = vld [vmem:[%s5 + $0x10] sm:$0xff]
        %v638 = vld [vmem:[%s5 + $0x18] sm:$0xff]
        %v639 = vld [vmem:[%s5 + $0x20] sm:$0xff]
        %v640 = vld [vmem:[%s5 + $0x28] sm:$0xff]
        %v641 = vld [vmem:[%s5 + $0x30] sm:$0xff]
        %v642 = vld [vmem:[%s5 + $0x38] sm:$0xff]
        %v643 = vld [vmem:[%s5 + $0x40] sm:$0xff]
        %v644 = vld [vmem:[%s5 + $0x48] sm:$0xff]
        %v645 = vld [vmem:[%s5 + $0x50] sm:$0xff]
        %v646 = vld [vmem:[%s5 + $0x58] sm:$0xff]
        %v647 = vld [vmem:[%s5 + $0x60] sm:$0xff]
        %v648 = vld [vmem:[%s5 + $0x68] sm:$0xff]
        %v649 = vld [vmem:[%s5 + $0x70] sm:$0xff]
        %v650 = vld [vmem:[%s5 + $0x78] sm:$0xff]
        %v651 = vld [vmem:[%s5 + $0x80] sm:$0xff]
        %v652 = vld [vmem:[%s5 + $0x88] sm:$0xff]
        %v653 = vld [vmem:[%s5 + $0x90] sm:$0xff]
        %v654 = vld [vmem:[%s5 + $0x98] sm:$0xff]
        %v655 = vld [vmem:[%s5 + $0xa0] sm:$0xff]
        %v656 = vld [vmem:[%s5 + $0xa8] sm:$0xff]
        %v657 = vld [vmem:[%s5 + $0xb0] sm:$0xff]
        %v658 = vld [vmem:[%s5 + $0xb8] sm:$0xff]
        %v659 = vld [vmem:[%s5 + $0xc0] sm:$0xff]
        %v660 = vld [vmem:[%s5 + $0xc8] sm:$0xff]
        %v661 = vld [vmem:[%s5 + $0xd0] sm:$0xff]
        %v662 = vld [vmem:[%s5 + $0xd8] sm:$0xff]
        %v663 = vld [vmem:[%s5 + $0xe0] sm:$0xff]
        %v664 = vld [vmem:[%s5 + $0xe8] sm:$0xff]
        %v665 = vld [vmem:[%s5 + $0xf0] sm:$0xff]
        %v666 = vld [vmem:[%s5 + $0xf8] sm:$0xff]
        %v667 = vld [vmem:[%s5 + $0x100] sm:$0xff]
        %v668 = vld [vmem:[%s5 + $0x108] sm:$0xff]
        %v669 = vld [vmem:[%s5 + $0x110] sm:$0xff]
        %v670 = vld [vmem:[%s5 + $0x118] sm:$0xff]
        %v671 = vld [vmem:[%s5 + $0x120] sm:$0xff]
        %v672 = vld [vmem:[%s5 + $0x128] sm:$0xff]
        %v673 = vld [vmem:[%s5 + $0x130] sm:$0xff]
        %v674 = vld [vmem:[%s5 + $0x138] sm:$0xff]
        %v675 = vld [vmem:[%s5 + $0x140] sm:$0xff]
        %v676 = vld [vmem:[%s5 + $0x148] sm:$0xff]
        %v677 = vld [vmem:[%s5 + $0x150] sm:$0xff]
        %v678 = vld [vmem:[%s5 + $0x158] sm:$0xff]
        %v679 = vld [vmem:[%s5 + $0x160] sm:$0xff]
        %v680 = vld [vmem:[%s5 + $0x168] sm:$0xff]
        %v681 = vld [vmem:[%s5 + $0x170] sm:$0xff]
        %v682 = vld [vmem:[%s5 + $0x178] sm:$0xff]
        %v683 = vld [vmem:[%s5 + $0x180] sm:$0xff]
        %v684 = vld [vmem:[%s5 + $0x188] sm:$0xff]
        %v685 = vld [vmem:[%s5 + $0x190] sm:$0xff]
        %v686 = vld [vmem:[%s5 + $0x198] sm:$0xff]
        %v687 = vld [vmem:[%s5 + $0x1a0] sm:$0xff]
        %v688 = vld [vmem:[%s5 + $0x1a8] sm:$0xff]
        %v689 = vld [vmem:[%s5 + $0x1b0] sm:$0xff]
        %v690 = vld [vmem:[%s5 + $0x1b8] sm:$0xff]
        %v691 = vld [vmem:[%s6] sm:$0x1]
        %vm692 = vcmask 523264
        %v694 = vsel %vm692, %v634, 0
        %696 = vmatpush.msra.mxu0 %v650
        %697 = vmatpush.msra.mxu0 %v649
        %698 = vmatpush.msra.mxu0 %v648
        %699 = vmatpush.msra.mxu0 %v647
        %700 = vmatpush.msra.mxu0 %v646
        %701 = vmatpush.msra.mxu0 %v645
        %702 = vmatpush.msra.mxu0 %v644
        %703 = vmatpush.msra.mxu0 %v643
        %704 = vmatpush.msra.mxu0 %v642
        %705 = vmatpush.msra.mxu0 %v641
        %706 = vmatpush.msra.mxu0 %v640
        %707 = vmatpush.msra.mxu0 %v639
        %708 = vmatpush.msra.mxu0 %v638
        %709 = vmatpush.msra.mxu0 %v637
        %710 = vmatpush.msra.mxu0 %v636
        %711 = vmatpush.msra.mxu0 %v635
        %712 = vmatmul.f32.gmra.mxu0 %v624
        %v713 = vpop.f32.mrf.mxu0
        %v714 = vadd.f32 %v691, %v713
        %715 = vdwg.mxu0
        %716 = vmatpush.msra.mxu0 %v666
        %717 = vmatpush.msra.mxu0 %v665
        %718 = vmatpush.msra.mxu0 %v664
        %719 = vmatpush.msra.mxu0 %v663
        %720 = vmatpush.msra.mxu0 %v662
        %721 = vmatpush.msra.mxu0 %v661
        %722 = vmatpush.msra.mxu0 %v660
        %723 = vmatpush.msra.mxu0 %v659
        %724 = vmatpush.msra.mxu0 %v658
        %725 = vmatpush.msra.mxu0 %v657
        %726 = vmatpush.msra.mxu0 %v656
        %727 = vmatpush.msra.mxu0 %v655
        %728 = vmatpush.msra.mxu0 %v654
        %729 = vmatpush.msra.mxu0 %v653
        %730 = vmatpush.msra.mxu0 %v652
        %731 = vmatpush.msra.mxu0 %v651
        %732 = vmatmul.f32.gmra.mxu0 %v628
        %v733 = vpop.f32.mrf.mxu0
        %v734 = vadd.f32 %v714, %v733
        %735 = vdwg.mxu0
        %736 = vmatpush.msra.mxu0 %v682
        %737 = vmatpush.msra.mxu0 %v681
        %738 = vmatpush.msra.mxu0 %v680
        %739 = vmatpush.msra.mxu0 %v679
        %740 = vmatpush.msra.mxu0 %v678
        %741 = vmatpush.msra.mxu0 %v677
        %742 = vmatpush.msra.mxu0 %v676
        %743 = vmatpush.msra.mxu0 %v675
        %744 = vmatpush.msra.mxu0 %v674
        %745 = vmatpush.msra.mxu0 %v673
        %746 = vmatpush.msra.mxu0 %v672
        %747 = vmatpush.msra.mxu0 %v671
        %748 = vmatpush.msra.mxu0 %v670
        %749 = vmatpush.msra.mxu0 %v669
        %750 = vmatpush.msra.mxu0 %v668
        %751 = vmatpush.msra.mxu0 %v667
        %752 = vmatmul.f32.gmra.mxu0 %v632
        %v753 = vpop.f32.mrf.mxu0
        %v754 = vadd.f32 %v734, %v753
        %755 = vdwg.mxu0
        %756 = vmatpush.msra.mxu0 0.0
        %757 = vmatpush.msra.mxu0 0.0
        %758 = vmatpush.msra.mxu0 0.0
        %759 = vmatpush.msra.mxu0 0.0
        %760 = vmatpush.msra.mxu0 0.0
        %761 = vmatpush.msra.mxu0 0.0
        %762 = vmatpush.msra.mxu0 0.0
        %763 = vmatpush.msra.mxu0 0.0
        %764 = vmatpush.msra.mxu0 %v690
        %765 = vmatpush.msra.mxu0 %v689
        %766 = vmatpush.msra.mxu0 %v688
        %767 = vmatpush.msra.mxu0 %v687
        %768 = vmatpush.msra.mxu0 %v686
        %769 = vmatpush.msra.mxu0 %v685
        %770 = vmatpush.msra.mxu0 %v684
        %771 = vmatpush.msra.mxu0 %v683
        %772 = vmatmul.f32.gmra.mxu0 %v694
        %v773 = vpop.f32.mrf.mxu0
        %v774 = vadd.f32 %v754, %v773
        %775 = vdwg.mxu0
        %vm776 = vcmask 253952
        %v777 = vsel %vm776, %v774, 0.0
        %778 = vadd.xlane.f32.xlu0 %v777
        %v779 = vpop.xlane.xlu0 %778
        %v780 = vrcp.pop 32.0
        %v781 = vmul.f32 32.0, %v780
        %v782 = vsub.f32 1.0, %v781
        %v783 = vmul.f32 %v780, %v782
        %v784 = vadd.f32 %v780, %v783
        %vm785 = vweird.f32 %v780
        %v786 = vsel %vm785, %v780, %v784
        %v787 = vmul.f32 %v779, %v786
        %v788 = vsub.f32 %v774, %v787
        %v789 = vmul.f32 %v788, %v788
        %v790 = vsel %vm776, %v789, 0.0
        %791 = vadd.xlane.f32.xlu0 %v790
        %v792 = vpop.xlane.xlu0 %791
        %v793 = vmul.f32 %v792, %v786
        %v794 = vadd.f32 %v793, 1e-05
        %v795 = vrsqrt.pop %v794
        %v796 = vmul.f32 %v795, %v794
        %v797 = vmul.f32 %v796, %v795
        %v798 = vmul.f32 0.5, %v797
        %v799 = vsub.f32 1.5, %v798
        %v800 = vmul.f32 %v795, %v799
        %vm801 = vweird.f32 %v794
        %vm802 = vweird.f32 %v795
        %vm803 = vmor %vm801, %vm802
        %v804 = vsel %vm803, %v795, %v800
        %v805 = vmul.f32 %v788, %v804
        %v806 = vld [vmem:[%s7] sm:$0x1]
        %v807 = vmul.f32 %v805, %v806
        %v808 = vld [vmem:[%s8] sm:$0x1]
        %v809 = vadd.f32 %v807, %v808
        %v810 = vtanh.pop %v809
        %v811 = vld [vmem:[%s9] sm:$0xff]
        %v812 = vld [vmem:[%s9 + $0x8] sm:$0xff]
        %v813 = vld [vmem:[%s9 + $0x10] sm:$0xff]
        %v814 = vld [vmem:[%s9 + $0x18] sm:$0xff]
        %v815 = vld [vmem:[%s10] sm:$0x1]
        %vm816 = vcmask 261120
        %v818 = vsel %vm816, %v810, 0
        %820 = vmatpush.msra.mxu0 0.0
        %821 = vmatpush.msra.mxu0 0.0
        %822 = vmatpush.msra.mxu0 0.0
        %823 = vmatpush.msra.mxu0 0.0
        %824 = vmatpush.msra.mxu0 0.0
        %825 = vmatpush.msra.mxu0 0.0
        %826 = vmatpush.msra.mxu0 0.0
        %827 = vmatpush.msra.mxu0 0.0
        %828 = vmatpush.msra.mxu0 0.0
        %829 = vmatpush.msra.mxu0 0.0
        %830 = vmatpush.msra.mxu0 0.0
        %831 = vmatpush.msra.mxu0 0.0
        %832 = vmatpush.msra.mxu0 %v814
        %833 = vmatpush.msra.mxu0 %v813
        %834 = vmatpush.msra.mxu0 %v812
        %835 = vmatpush.msra.mxu0 %v811
        %836 = vmatmul.f32.gmra.mxu0 %v818
        %v837 = vpop.f32.mrf.mxu0
        %v838 = vadd.f32 %v815, %v837
        %839 = vdwg.mxu0
        %v840 = vmax.f32 %v838, 0.0
        %v841 = vld [vmem:[%s11] sm:$0xff]
        %v842 = vld [vmem:[%s11 + $0x8] sm:$0xff]
        %v843 = vld [vmem:[%s11 + $0x10] sm:$0xff]
        %v844 = vld [vmem:[%s11 + $0x18] sm:$0xff]
        %v845 = vld [vmem:[%s12] sm:$0x1]
        %v847 = vsel %vm816, %v840, 0
        %849 = vmatpush.msra.mxu0 0.0
        %850 = vmatpush.msra.mxu0 0.0
        %851 = vmatpush.msra.mxu0 0.0
        %852 = vmatpush.msra.mxu0 0.0
        %853 = vmatpush.msra.mxu0 0.0
        %854 = vmatpush.msra.mxu0 0.0
        %855 = vmatpush.msra.mxu0 0.0
        %856 = vmatpush.msra.mxu0 0.0
        %857 = vmatpush.msra.mxu0 0.0
        %858 = vmatpush.msra.mxu0 0.0
        %859 = vmatpush.msra.mxu0 0.0
        %860 = vmatpush.msra.mxu0 0.0
        %861 = vmatpush.msra.mxu0 %v844
        %862 = vmatpush.msra.mxu0 %v843
        %863 = vmatpush.msra.mxu0 %v842
        %864 = vmatpush.msra.mxu0 %v841
        %865 = vmatmul.f32.gmra.mxu0 %v847
        %v866 = vpop.f32.mrf.mxu0
        %v867 = vadd.f32 %v845, %v866
        %868 = vdwg.mxu0
        %v869 = vmax.f32 %v867, 0.0
        %v870 = vld [vmem:[%s13] sm:$0xff]
        %v871 = vld [vmem:[%s13 + $0x8] sm:$0xff]
        %v872 = vld [vmem:[%s13 + $0x10] sm:$0xff]
        %v873 = vld [vmem:[%s13 + $0x18] sm:$0xff]
        %v874 = vld [vmem:[%s14] sm:$0x1]
        %v876 = vsel %vm816, %v869, 0
        %878 = vmatpush.msra.mxu0 0.0
        %879 = vmatpush.msra.mxu0 0.0
        %880 = vmatpush.msra.mxu0 0.0
        %881 = vmatpush.msra.mxu0 0.0
        %882 = vmatpush.msra.mxu0 0.0
        %883 = vmatpush.msra.mxu0 0.0
        %884 = vmatpush.msra.mxu0 0.0
        %885 = vmatpush.msra.mxu0 0.0
        %886 = vmatpush.msra.mxu0 0.0
        %887 = vmatpush.msra.mxu0 0.0
        %888 = vmatpush.msra.mxu0 0.0
        %889 = vmatpush.msra.mxu0 0.0
        %890 = vmatpush.msra.mxu0 %v873
        %891 = vmatpush.msra.mxu0 %v872
        %892 = vmatpush.msra.mxu0 %v871
        %893 = vmatpush.msra.mxu0 %v870
        %894 = vmatmul.f32.gmra.mxu0 %v876
        %v895 = vpop.f32.mrf.mxu0
        %v896 = vadd.f32 %v874, %v895
        %897 = vdwg.mxu0
        %vm898 = vcmask 57344
        %899 = vst.msk [vmem:[%s486] sm:$0x1] %vm898, %v896
        %s900 = sand.u32 %s357, 1
        %s901 = scalar_lea.sflag [#allocation4], %s900
        %s902 = sand.u32 %s357, 1
        %s903 = scalar_lea.vmem [#allocation3], %s902
        // Predicated region
        $region81: #{prop_state_forward.1} parent=79 // pred_check
          %p904 = pneg %p367
        $region82: #{prop_state_forward.1} parent=79 // pred_check_branch
          %906 = sbr.rel (%p904) target = $region84
        $region83: #{prop_state_forward.1} parent=79 // pred_region
          %908 = vsyncadd %s901, 0
          %s909 = scalar_lea.hbm %s15, %s29
          %s911 = sshll.u32 %s903, 4
          %s912 = int_to_ptr.vmem [resolvable:$true] %s911
          %s913 = sshll.u32 %s909, 4
          %s914 = int_to_ptr.hbm [resolvable:$true] %s913
          %916 = dma.vmem_to_hbm [thread:$0]  %s912, 16, %s914, %s901
        $region84: #{prop_state_forward.1} parent=79 // pred_fallthru
          _
      $region80: #{prop_state_forward.1} parent=5 // pred_fallthru
        _
      %p917 = scmp.le.s32.totalorder 2, %s24
      // Predicated region
      $region85: #{prop_state_forward.1} parent=5 // pred_check
        %p918 = pneg %p917
      $region86: #{prop_state_forward.1} parent=5 // pred_check_branch
        %920 = sbr.rel (%p918) target = $region88
      $region87: #{prop_state_forward.1} parent=5 // pred_region
        %s921 = ssub.s32 %s24, 2
        // Predicated region
        $region89: #{prop_state_forward.1} parent=87 // pred_check
          %p922 = pneg %p373
        $region90: #{prop_state_forward.1} parent=87 // pred_check_branch
          %924 = sbr.rel (%p922) target = $region92
        $region91: #{prop_state_forward.1} parent=87 // pred_region
          %s925 = sand.u32 %s358, 1
          %s926 = scalar_lea.sflag [#allocation4], %s925
          %s927 = sand.u32 %s358, 1
          %s928 = scalar_lea.vmem [#allocation3], %s927
          %930 = dma.done %s926, 16
        $region92: #{prop_state_forward.1} parent=87 // pred_fallthru
          _
      $region88: #{prop_state_forward.1} parent=5 // pred_fallthru
        _
    $region6: #{prop_state_forward.1} parent=1 // loop_footer
      %s28 = sadd.s32 1, %s24
    $region7: #{prop_state_forward.1} parent=1 // loop_footer_branch
      %23 = sbr.rel target = $region3
    $region8: #{prop_state_forward.1} parent=1 // loop_exit
      _
    %931 = vsyncpa [#allocation4], 1
    %s932 = scalar_lea.sflag [#allocation4], 1
    %933 = vsyncpa %s932, 1

</llo_original>
